<compile_context>
chip_gen: v7x
topology: tpu7x:2x2x1
jax: 0.10.0
libtpu: 0.0.40
codegen_flags: <defaults>
</compile_context>

<pallas_src>
import jax
import jax.numpy as jnp
import numpy as np
from jax.experimental import pallas as pl
from jax.experimental.pallas import tpu as pltpu


# ----------------------------------------------------------------------------
# Fused whole-graph kernel: one invocation, both branches, concat via stores
# ----------------------------------------------------------------------------
def _fused_graph_kernel(x0_ref, x1_ref, w0_ref, b0_ref, w1_ref, b1_ref,
                        w2_ref, b2_ref, o_ref):
    """out[0:B]  = relu(x0 @ W0 + b0) @ W2 + b2
       out[B:2B] = relu(x1 @ W1 + b1) @ W2 + b2

    Shapes seen by the kernel (all full blocks, VMEM-resident):
      x0/x1 : (B, IN)    w0/w1 : (IN, H)    b0/b1 : (1, H)
      w2    : (H, OUT)   b2    : (1, OUT)   o     : (2B, OUT)
    """
    batch = x0_ref.shape[0]          # static Python int at trace time

    # branch 0 (ReLU fused into the matmul epilogue; f32 MXU accumulation)
    h0 = jnp.dot(x0_ref[...], w0_ref[...],
                 preferred_element_type=jnp.float32) + b0_ref[...]
    h0 = jnp.maximum(h0, 0.0)
    y0 = jnp.dot(h0, w2_ref[...],
                 preferred_element_type=jnp.float32) + b2_ref[...]
    o_ref[0:batch, :] = y0.astype(o_ref.dtype)

    # branch 1 — writes the second row block: concat is free
    h1 = jnp.dot(x1_ref[...], w1_ref[...],
                 preferred_element_type=jnp.float32) + b1_ref[...]
    h1 = jnp.maximum(h1, 0.0)
    y1 = jnp.dot(h1, w2_ref[...],
                 preferred_element_type=jnp.float32) + b2_ref[...]
    o_ref[batch:2 * batch, :] = y1.astype(o_ref.dtype)


def _build_fused_forward(w0_t, b0, w1_t, b1, w2_t, b2):
    """Returns a jitted fused forward for the two-branch graph.

    w0_t / w1_t : (IN, H)  pre-transposed branch weights
    b0   / b1   : (1, H)   branch biases
    w2_t        : (H, OUT) pre-transposed shared output weight
    b2          : (1, OUT) output bias
    """
    in_f, hid = w0_t.shape
    out_f = w2_t.shape[1]

    def _full(shape):
        # whole-array block, no grid: one DMA in, one DMA out
        return pl.BlockSpec(shape, lambda: tuple(0 for _ in shape))

    @jax.jit
    def fused(x0, x1):
        # NOTE: batch is baked into the trace — pad/bucket variable batch
        # sizes before calling to avoid retrace + Mosaic recompile.
        batch = x0.shape[0]
        flops = 2 * batch * in_f * hid * 2 + 2 * batch * hid * out_f * 2
        bytes_accessed = 4 * (2 * batch * in_f            # x0, x1
                              + 2 * in_f * hid + hid * out_f   # weights
                              + 2 * hid + out_f                # biases
                              + 2 * batch * out_f)             # output
        return pl.pallas_call(
            _fused_graph_kernel,
            out_shape=jax.ShapeDtypeStruct((2 * batch, out_f), jnp.float32),
            in_specs=[
                _full((batch, in_f)), _full((batch, in_f)),
                _full((in_f, hid)), _full((1, hid)),
                _full((in_f, hid)), _full((1, hid)),
                _full((hid, out_f)), _full((1, out_f)),
            ],
            out_specs=_full((2 * batch, out_f)),
            cost_estimate=pl.CostEstimate(flops=flops, transcendentals=0,
                                          bytes_accessed=bytes_accessed),
        )(x0.astype(jnp.float32), x1.astype(jnp.float32),
          w0_t, b0, w1_t, b1, w2_t, b2)

    return fused


# ----------------------------------------------------------------------------
# Generic per-layer Pallas kernels (fallback path for arbitrary graphs)
# ----------------------------------------------------------------------------
def _linear_kernel(x_ref, w_ref, b_ref, o_ref):
    # x: (M, K), w: (K, N) pre-transposed, b: (1, N)
    y = jnp.dot(x_ref[...], w_ref[...], preferred_element_type=jnp.float32)
    o_ref[...] = (y + b_ref[...]).astype(o_ref.dtype)


def _relu_kernel(x_ref, o_ref):
    o_ref[...] = jnp.maximum(x_ref[...], 0.0)


class PallasLinear:
    """PyTorch-convention Linear (y = x @ W.T + b); weight stored pre-transposed."""

    def __init__(self, w, b):
        w = jnp.asarray(w, jnp.float32)            # (out, in) — PyTorch layout
        self.w_t = w.T                             # (in, out) — MXU-friendly
        self.b = jnp.asarray(b, jnp.float32).reshape(1, -1)

    def __call__(self, x):
        m, k = x.shape
        n = self.w_t.shape[1]
        return pl.pallas_call(
            _linear_kernel,
            out_shape=jax.ShapeDtypeStruct((m, n), jnp.float32),
            in_specs=[
                pl.BlockSpec((m, k), lambda: (0, 0)),
                pl.BlockSpec((k, n), lambda: (0, 0)),
                pl.BlockSpec((1, n), lambda: (0, 0)),
            ],
            out_specs=pl.BlockSpec((m, n), lambda: (0, 0)),
        )(x.astype(jnp.float32), self.w_t, self.b)


class PallasReLU:
    def __call__(self, x):
        m, n = x.shape
        return pl.pallas_call(
            _relu_kernel,
            out_shape=jax.ShapeDtypeStruct((m, n), jnp.float32),
            in_specs=[pl.BlockSpec((m, n), lambda: (0, 0))],
            out_specs=pl.BlockSpec((m, n), lambda: (0, 0)),
        )(x.astype(jnp.float32))


# ----------------------------------------------------------------------------
# JAX equivalent of ModelFromInitLayers.forward
# ----------------------------------------------------------------------------
class ModelFromInitLayersJAX:
    def __init__(self, init_layers, input_layers, output_layers):
        self.layers = init_layers
        self.input_layers = input_layers
        self.output_layers = output_layers
        self._fused = self._maybe_build_fused()

    # Detect the canonical pattern:
    #   in0 -> Linear -> ReLU \
    #                          concat -> Linear -> out
    #   in1 -> Linear -> ReLU /
    # and compile it into one fused pallas_call.  Otherwise fall back to the
    # generic per-layer executor (same semantics as the PyTorch module).
    def _maybe_build_fused(self):
        try:
            if len(self.input_layers) != 2 or len(self.output_layers) != 1:
                return None
            out_lay = self.layers[self.output_layers[0]]
            fc2 = out_lay["activation"]
            if not isinstance(fc2, PallasLinear):
                return None
            cat_lay = self.layers[out_lay["input"]]
            if cat_lay["activation"] != "concat" or len(cat_lay["input"]) != 2:
                return None
            branch_fcs = []
            for k, src in enumerate(cat_lay["input"]):
                relu_lay = self.layers[src]
                if not isinstance(relu_lay["activation"], PallasReLU):
                    return None
                fc_lay = self.layers[relu_lay["input"]]
                fc = fc_lay["activation"]
                if not isinstance(fc, PallasLinear):
                    return None
                if fc_lay["input"] != self.input_layers[k]:
                    return None
                branch_fcs.append(fc)
            fc0, fc1 = branch_fcs
            if fc0.w_t.shape != fc1.w_t.shape:
                return None
            if fc0.w_t.shape[1] != fc2.w_t.shape[0]:
                return None
            return _build_fused_forward(fc0.w_t, fc0.b, fc1.w_t, fc1.b,
                                        fc2.w_t, fc2.b)
        except (KeyError, TypeError, AttributeError):
            return None

    def forward(self, data):
        for i in range(len(data)):
            self.layers[self.input_layers[i]]["tensor"] = jnp.asarray(data[i])

        if self._fused is not None:
            x0 = self.layers[self.input_layers[0]]["tensor"]
            x1 = self.layers[self.input_layers[1]]["tensor"]
            # fused path needs equal branch shapes and sublane-aligned halves;
            # otherwise we hit the slower 5-kernel fallback below.
            if x0.shape == x1.shape and x0.shape[0] % 8 == 0:
                out = self._fused(x0, x1)
                self.layers[self.output_layers[0]]["tensor"] = out
                return [out]

        # generic fallback — identical control flow to the PyTorch module
        # TODO(synk): fuse Linear+ReLU and kill the concat in this fallback
        # too; left per-layer for generality since the demo takes the fused path.
        for key, lay in self.layers.items():
            if lay["activation"] == "input":
                pass
            elif lay["activation"] == "concat":
                cat_this = [self.layers[p]["tensor"] for p in lay["input"]]
                # concat is pure data placement — leave it to XLA, no kernel
                lay["tensor"] = jnp.concatenate(cat_this, axis=0)
            else:
                source = lay["input"]
                lay["tensor"] = lay["activation"](self.layers[source]["tensor"])
        return [self.layers[o]["tensor"] for o in self.output_layers]


# ----------------------------------------------------------------------------
# Deterministic graph construction + run
# ----------------------------------------------------------------------------
if __name__ == "__main__":
    key = jax.random.PRNGKey(0)
    k0, k1, k2, k3, k4, k5, kx0, kx1 = jax.random.split(key, 8)

    # lane-dense feature dims (multiples of 128)
    BATCH, IN, HIDDEN, OUT = 8, 128, 128, 128

    # deterministic parameters (PyTorch Linear layout: (out, in))
    w0 = jax.random.normal(k0, (HIDDEN, IN), jnp.float32) * 0.1
    b0 = jax.random.normal(k1, (HIDDEN,), jnp.float32) * 0.1
    w1 = jax.random.normal(k2, (HIDDEN, IN), jnp.float32) * 0.1
    b1 = jax.random.normal(k3, (HIDDEN,), jnp.float32) * 0.1
    w2 = jax.random.normal(k4, (OUT, HIDDEN), jnp.float32) * 0.1
    b2 = jax.random.normal(k5, (OUT,), jnp.float32) * 0.1

    init_layers = {
        "in0": {"activation": "input", "tensor": None},
        "in1": {"activation": "input", "tensor": None},
        "fc0": {"activation": PallasLinear(w0, b0), "input": "in0"},
        "relu0": {"activation": PallasReLU(), "input": "fc0"},
        "fc1": {"activation": PallasLinear(w1, b1), "input": "in1"},
        "relu1": {"activation": PallasReLU(), "input": "fc1"},
        "cat": {"activation": "concat", "input": ["relu0", "relu1"]},
        "fc2": {"activation": PallasLinear(w2, b2), "input": "cat"},
    }
    model = ModelFromInitLayersJAX(init_layers, ["in0", "in1"], ["fc2"])
    assert model._fused is not None  # the demo graph must take the fused path

    # example inputs (the PyTorch module receives numpy arrays)
    x0 = np.asarray(jax.random.normal(kx0, (BATCH, IN), jnp.float32))
    x1 = np.asarray(jax.random.normal(kx1, (BATCH, IN), jnp.float32))

    # fused single-pallas_call path
    out = jax.block_until_ready(model.forward([x0, x1])[0])

    # pure-JAX reference for correctness
    def ref(x0, x1):
        h0 = jnp.maximum(jnp.asarray(x0) @ w0.T + b0, 0.0)
        h1 = jnp.maximum(jnp.asarray(x1) @ w1.T + b1, 0.0)
        c = jnp.concatenate([h0, h1], axis=0)
        return c @ w2.T + b2

    expected = np.asarray(ref(x0, x1))
    assert out.shape == (2 * BATCH, OUT)
    np.testing.assert_allclose(np.asarray(out), expected, rtol=1e-4, atol=1e-4)

    # also exercise the generic per-layer fallback path once
    model._fused = None
    out_generic = jax.block_until_ready(model.forward([x0, x1])[0])
    np.testing.assert_allclose(np.asarray(out_generic), expected,
                               rtol=1e-4, atol=1e-4)

    print("KERNEL_OK")
</pallas_src>

<mosaic_0001>
module attributes {stable_mosaic.version = 11 : i64} {
  func.func @_fused_graph_kernel(%arg0: memref<8x128xf32, #tpu.memory_space<vmem>>, %arg1: memref<8x128xf32, #tpu.memory_space<vmem>>, %arg2: memref<128x128xf32, #tpu.memory_space<vmem>>, %arg3: memref<1x128xf32, #tpu.memory_space<vmem>>, %arg4: memref<128x128xf32, #tpu.memory_space<vmem>>, %arg5: memref<1x128xf32, #tpu.memory_space<vmem>>, %arg6: memref<128x128xf32, #tpu.memory_space<vmem>>, %arg7: memref<1x128xf32, #tpu.memory_space<vmem>>, %arg8: memref<16x128xf32, #tpu.memory_space<vmem>>) attributes {dimension_semantics = [], scalar_prefetch = 0 : i64, scratch_operands = 0 : i64, tpu.core_type = #tpu.core_type<tc>} {
    %c0 = arith.constant 0 : index
    %c0_0 = arith.constant 0 : index
    %0 = vector.load %arg0[%c0, %c0_0] : memref<8x128xf32, #tpu.memory_space<vmem>>, vector<8x128xf32>
    %c0_1 = arith.constant 0 : index
    %c0_2 = arith.constant 0 : index
    %1 = vector.load %arg2[%c0_1, %c0_2] : memref<128x128xf32, #tpu.memory_space<vmem>>, vector<128x128xf32>
    %cst = arith.constant dense<0.000000e+00> : vector<8x128xf32>
    %2 = tpu.matmul %0, %1, %cst {dimension_numbers = #tpu.dot_dimension_numbers<[1], [0], [0], [1], [0, 0, 1, 1], [], []>} : vector<8x128xf32>, vector<128x128xf32>, vector<8x128xf32> -> vector<8x128xf32>
    %c0_3 = arith.constant 0 : index
    %c0_4 = arith.constant 0 : index
    %3 = vector.load %arg3[%c0_3, %c0_4] : memref<1x128xf32, #tpu.memory_space<vmem>>, vector<1x128xf32>
    %4 = vector.broadcast %3 : vector<1x128xf32> to vector<8x128xf32>
    %5 = arith.addf %2, %4 : vector<8x128xf32>
    %cst_5 = arith.constant 0.000000e+00 : f32
    %6 = vector.broadcast %cst_5 : f32 to vector<8x128xf32>
    %7 = arith.maximumf %5, %6 : vector<8x128xf32>
    %c0_6 = arith.constant 0 : index
    %c0_7 = arith.constant 0 : index
    %8 = vector.load %arg6[%c0_6, %c0_7] : memref<128x128xf32, #tpu.memory_space<vmem>>, vector<128x128xf32>
    %cst_8 = arith.constant dense<0.000000e+00> : vector<8x128xf32>
    %9 = tpu.matmul %7, %8, %cst_8 {dimension_numbers = #tpu.dot_dimension_numbers<[1], [0], [0], [1], [0, 0, 1, 1], [], []>} : vector<8x128xf32>, vector<128x128xf32>, vector<8x128xf32> -> vector<8x128xf32>
    %c0_9 = arith.constant 0 : index
    %c0_10 = arith.constant 0 : index
    %10 = vector.load %arg7[%c0_9, %c0_10] : memref<1x128xf32, #tpu.memory_space<vmem>>, vector<1x128xf32>
    %11 = vector.broadcast %10 : vector<1x128xf32> to vector<8x128xf32>
    %12 = arith.addf %9, %11 : vector<8x128xf32>
    %c0_11 = arith.constant 0 : index
    %c0_12 = arith.constant 0 : index
    %13 = vector.load %arg8[%c0_11, %c0_12] : memref<16x128xf32, #tpu.memory_space<vmem>>, vector<8x128xf32>
    tpu.vector_store %arg8[%c0_11, %c0_12], %12 {strides = array<i32>} : memref<16x128xf32, #tpu.memory_space<vmem>>, vector<8x128xf32>,
    %c0_13 = arith.constant 0 : index
    %c0_14 = arith.constant 0 : index
    %14 = vector.load %arg1[%c0_13, %c0_14] : memref<8x128xf32, #tpu.memory_space<vmem>>, vector<8x128xf32>
    %c0_15 = arith.constant 0 : index
    %c0_16 = arith.constant 0 : index
    %15 = vector.load %arg4[%c0_15, %c0_16] : memref<128x128xf32, #tpu.memory_space<vmem>>, vector<128x128xf32>
    %cst_17 = arith.constant dense<0.000000e+00> : vector<8x128xf32>
    %16 = tpu.matmul %14, %15, %cst_17 {dimension_numbers = #tpu.dot_dimension_numbers<[1], [0], [0], [1], [0, 0, 1, 1], [], []>} : vector<8x128xf32>, vector<128x128xf32>, vector<8x128xf32> -> vector<8x128xf32>
    %c0_18 = arith.constant 0 : index
    %c0_19 = arith.constant 0 : index
    %17 = vector.load %arg5[%c0_18, %c0_19] : memref<1x128xf32, #tpu.memory_space<vmem>>, vector<1x128xf32>
    %18 = vector.broadcast %17 : vector<1x128xf32> to vector<8x128xf32>
    %19 = arith.addf %16, %18 : vector<8x128xf32>
    %cst_20 = arith.constant 0.000000e+00 : f32
    %20 = vector.broadcast %cst_20 : f32 to vector<8x128xf32>
    %21 = arith.maximumf %19, %20 : vector<8x128xf32>
    %c0_21 = arith.constant 0 : index
    %c0_22 = arith.constant 0 : index
    %22 = vector.load %arg6[%c0_21, %c0_22] : memref<128x128xf32, #tpu.memory_space<vmem>>, vector<128x128xf32>
    %cst_23 = arith.constant dense<0.000000e+00> : vector<8x128xf32>
    %23 = tpu.matmul %21, %22, %cst_23 {dimension_numbers = #tpu.dot_dimension_numbers<[1], [0], [0], [1], [0, 0, 1, 1], [], []>} : vector<8x128xf32>, vector<128x128xf32>, vector<8x128xf32> -> vector<8x128xf32>
    %c0_24 = arith.constant 0 : index
    %c0_25 = arith.constant 0 : index
    %24 = vector.load %arg7[%c0_24, %c0_25] : memref<1x128xf32, #tpu.memory_space<vmem>>, vector<1x128xf32>
    %25 = vector.broadcast %24 : vector<1x128xf32> to vector<8x128xf32>
    %26 = arith.addf %23, %25 : vector<8x128xf32>
    %c8 = arith.constant 8 : index
    %c0_26 = arith.constant 0 : index
    %27 = vector.load %arg8[%c8, %c0_26] : memref<16x128xf32, #tpu.memory_space<vmem>>, vector<8x128xf32>
    tpu.vector_store %arg8[%c8, %c0_26], %26 {strides = array<i32>} : memref<16x128xf32, #tpu.memory_space<vmem>>, vector<8x128xf32>,
    return
  }
}

</mosaic_0001>

<llo_original>
// kernel: fused.1
$region0: #{fused.1}
  #allocation0 [shape = 'u32[]', space=smem, size = 0x4, offset = 0x4, fixed_abs, tag = 'smem constant byte address 0x4 - core index']
  #allocation1 [shape = 'u32[144,128]{1,0:T(1,128)}', space=vmem, size = 0x12000, scoped, tag = 'internal scratch']
  %s0 = inlined_call_operand.hbm [shape: f32[8,128], index: 0, kind: input, shape index: {}]
  %s1 = inlined_call_operand.hbm [shape: f32[8,128], index: 1, kind: input, shape index: {}]
  %s2 = inlined_call_operand.hbm [shape: f32[128,128], index: 2, kind: input, shape index: {}]
  %s3 = inlined_call_operand.vmem [shape: f32[1,128], index: 3, kind: input, shape index: {}]
  %s4 = inlined_call_operand.hbm [shape: f32[128,128], index: 4, kind: input, shape index: {}]
  %s5 = inlined_call_operand.vmem [shape: f32[1,128], index: 5, kind: input, shape index: {}]
  %s6 = inlined_call_operand.hbm [shape: f32[128,128], index: 6, kind: input, shape index: {}]
  %s7 = inlined_call_operand.vmem [shape: f32[1,128], index: 7, kind: input, shape index: {}]
  %s8 = inlined_call_operand.hbm [shape: f32[16,128], index: 8, kind: output, shape index: {}]
  %s9 = sld [smem:[#allocation0]]
  $region62: #{fused.1} parent=0
    _
  %s11 = ssub.s32 1, %s9
  %s12 = scalar_select 0, %s11, %s9
  $region1: #{fused.1} parent=0
    #allocation2 [shape = 'u8[4096]{0}', space=vmem, size = 0x1000, scoped, tag = 'input window, operand 0, single buffered']
    #allocation3 [shape = 's32[1]{0}', space=sflag, size = 0x4, scoped, tag = 'scoped memory for fused.1']
    #allocation4 [shape = 's32[1]{0}', space=sflag, size = 0x4, scoped, tag = 'scoped memory for fused.1']
    #allocation5 [shape = 'u8[4096]{0}', space=vmem, size = 0x1000, scoped, tag = 'input window, operand 1, single buffered']
    #allocation6 [shape = 's32[1]{0}', space=sflag, size = 0x4, scoped, tag = 'scoped memory for fused.1']
    #allocation7 [shape = 'u8[65536]{0}', space=vmem, size = 0x10000, scoped, tag = 'input window, operand 2, single buffered']
    #allocation8 [shape = 'u8[65536]{0}', space=vmem, size = 0x10000, scoped, tag = 'input window, operand 4, single buffered']
    #allocation9 [shape = 's32[1]{0}', space=sflag, size = 0x4, scoped, tag = 'scoped memory for fused.1']
    #allocation10 [shape = 'u8[65536]{0}', space=vmem, size = 0x10000, scoped, tag = 'input window, operand 6, single buffered']
    #allocation11 [shape = 'u8[8192]{0}', space=vmem, size = 0x2000, scoped, tag = 'output window, operand 0, single buffered']
    %13 = vsyncpa [#allocation3], 0
    %14 = vsyncpa [#allocation6], 0
    %15 = vsyncpa [#allocation9], 0
    %16 = vsyncpa [#allocation4], 0
    // Predicated region
    $region2: #{fused.1} parent=1 // pred_check
      _
    $region3: #{fused.1} parent=1 // pred_check_branch
      %18 = sbr.rel (0) target = $region5
    $region4: #{fused.1} parent=1 // pred_region
      %s20 = ssub.s32 128, 128
      %21 = vsyncadd [#allocation3], %s20
      %s23 = sshll.u32 [#allocation2], 4
      %s24 = int_to_ptr.vmem [resolvable:$true] %s23
      %26 = dma.hbm_to_vmem [thread:$0]  %s0, 128, %s24, [#allocation3]
    $region5: #{fused.1} parent=1 // pred_fallthru
      _
    // Predicated region
    $region6: #{fused.1} parent=1 // pred_check
      _
    $region7: #{fused.1} parent=1 // pred_check_branch
      %28 = sbr.rel (0) target = $region9
    $region8: #{fused.1} parent=1 // pred_region
      %s30 = ssub.s32 128, 128
      %31 = vsyncadd [#allocation6], %s30
      %s33 = sshll.u32 [#allocation5], 4
      %s34 = int_to_ptr.vmem [resolvable:$true] %s33
      %36 = dma.hbm_to_vmem [thread:$0]  %s1, 128, %s34, [#allocation6]
    $region9: #{fused.1} parent=1 // pred_fallthru
      _
    // Predicated region
    $region10: #{fused.1} parent=1 // pred_check
      _
    $region11: #{fused.1} parent=1 // pred_check_branch
      %38 = sbr.rel (0) target = $region13
    $region12: #{fused.1} parent=1 // pred_region
      %s40 = ssub.s32 2048, 2048
      %41 = vsyncadd [#allocation6], %s40
      %s42 = sshll.u32 [#allocation7], 4
      %s43 = int_to_ptr.vmem [resolvable:$true] %s42
      %48 = dma.hbm_to_vmem [thread:$0]  %s2, 2048, %s43, [#allocation6], 128, 128, 8
    $region13: #{fused.1} parent=1 // pred_fallthru
      _
    // Predicated region
    $region14: #{fused.1} parent=1 // pred_check
      _
    $region15: #{fused.1} parent=1 // pred_check_branch
      %50 = sbr.rel (0) target = $region17
    $region16: #{fused.1} parent=1 // pred_region
      _
    $region17: #{fused.1} parent=1 // pred_fallthru
      _
    // Predicated region
    $region18: #{fused.1} parent=1 // pred_check
      _
    $region19: #{fused.1} parent=1 // pred_check_branch
      %52 = sbr.rel (0) target = $region21
    $region20: #{fused.1} parent=1 // pred_region
      %s54 = ssub.s32 2048, 2048
      %55 = vsyncadd [#allocation9], %s54
      %s56 = sshll.u32 [#allocation8], 4
      %s57 = int_to_ptr.vmem [resolvable:$true] %s56
      %62 = dma.hbm_to_vmem [thread:$0]  %s4, 2048, %s57, [#allocation9], 128, 128, 8
    $region21: #{fused.1} parent=1 // pred_fallthru
      _
    // Predicated region
    $region22: #{fused.1} parent=1 // pred_check
      _
    $region23: #{fused.1} parent=1 // pred_check_branch
      %64 = sbr.rel (0) target = $region25
    $region24: #{fused.1} parent=1 // pred_region
      _
    $region25: #{fused.1} parent=1 // pred_fallthru
      _
    // Predicated region
    $region26: #{fused.1} parent=1 // pred_check
      _
    $region27: #{fused.1} parent=1 // pred_check_branch
      %66 = sbr.rel (0) target = $region29
    $region28: #{fused.1} parent=1 // pred_region
      %s68 = ssub.s32 2048, 2048
      %69 = vsyncadd [#allocation9], %s68
      %s70 = sshll.u32 [#allocation10], 4
      %s71 = int_to_ptr.vmem [resolvable:$true] %s70
      %76 = dma.hbm_to_vmem [thread:$0]  %s6, 2048, %s71, [#allocation9], 128, 128, 8
    $region29: #{fused.1} parent=1 // pred_fallthru
      _
    // Predicated region
    $region30: #{fused.1} parent=1 // pred_check
      _
    $region31: #{fused.1} parent=1 // pred_check_branch
      %78 = sbr.rel (0) target = $region33
    $region32: #{fused.1} parent=1 // pred_region
      _
    $region33: #{fused.1} parent=1 // pred_fallthru
      _
    // Predicated region
    $region34: #{fused.1} parent=1 // pred_check
      _
    $region35: #{fused.1} parent=1 // pred_check_branch
      %80 = sbr.rel (0) target = $region37
    $region36: #{fused.1} parent=1 // pred_region
      %81 = dma.done [#allocation3], 128
    $region37: #{fused.1} parent=1 // pred_fallthru
      _
    // Predicated region
    $region38: #{fused.1} parent=1 // pred_check
      _
    $region39: #{fused.1} parent=1 // pred_check_branch
      %83 = sbr.rel (0) target = $region41
    $region40: #{fused.1} parent=1 // pred_region
      %84 = dma.done [#allocation6], 128
    $region41: #{fused.1} parent=1 // pred_fallthru
      _
    // Predicated region
    $region42: #{fused.1} parent=1 // pred_check
      _
    $region43: #{fused.1} parent=1 // pred_check_branch
      %86 = sbr.rel (0) target = $region45
    $region44: #{fused.1} parent=1 // pred_region
      %87 = dma.done [#allocation6], 2048
    $region45: #{fused.1} parent=1 // pred_fallthru
      _
    // Predicated region
    $region46: #{fused.1} parent=1 // pred_check
      _
    $region47: #{fused.1} parent=1 // pred_check_branch
      %89 = sbr.rel (0) target = $region49
    $region48: #{fused.1} parent=1 // pred_region
      %90 = dma.done [#allocation9], 2048
    $region49: #{fused.1} parent=1 // pred_fallthru
      _
    // Predicated region
    $region50: #{fused.1} parent=1 // pred_check
      _
    $region51: #{fused.1} parent=1 // pred_check_branch
      %92 = sbr.rel (0) target = $region53
    $region52: #{fused.1} parent=1 // pred_region
      %93 = dma.done [#allocation9], 2048
    $region53: #{fused.1} parent=1 // pred_fallthru
      _
    %v94 = vld [vmem:[#allocation2] sm:$0xff]
    %v95 = vld [vmem:[#allocation7] sm:$0xff]
    %v96 = vld [vmem:[#allocation7 + $0x8] sm:$0xff]
    %v97 = vld [vmem:[#allocation7 + $0x10] sm:$0xff]
    %v98 = vld [vmem:[#allocation7 + $0x18] sm:$0xff]
    %v99 = vld [vmem:[#allocation7 + $0x20] sm:$0xff]
    %v100 = vld [vmem:[#allocation7 + $0x28] sm:$0xff]
    %v101 = vld [vmem:[#allocation7 + $0x30] sm:$0xff]
    %v102 = vld [vmem:[#allocation7 + $0x38] sm:$0xff]
    %v103 = vld [vmem:[#allocation7 + $0x40] sm:$0xff]
    %v104 = vld [vmem:[#allocation7 + $0x48] sm:$0xff]
    %v105 = vld [vmem:[#allocation7 + $0x50] sm:$0xff]
    %v106 = vld [vmem:[#allocation7 + $0x58] sm:$0xff]
    %v107 = vld [vmem:[#allocation7 + $0x60] sm:$0xff]
    %v108 = vld [vmem:[#allocation7 + $0x68] sm:$0xff]
    %v109 = vld [vmem:[#allocation7 + $0x70] sm:$0xff]
    %v110 = vld [vmem:[#allocation7 + $0x78] sm:$0xff]
    %v111 = vld [vmem:[%s3] sm:$0x1]
    %v113 = vlaneseq
    %v114 = vshrl.u32 %v113, 7
    %v115 = vsub.s32 0, %v114
    %v116 = vrot.slane %v111, %v115
    %118 = vmatprep.subr.mxu0 0.0
    %119 = vmatpush1.msra.mxu0 %v95
    %120 = vmatprep.subr.mxu0 0.0
    %121 = vmatpush1.msra.mxu0 %v96
    %122 = vmatprep.subr.mxu0 0.0
    %123 = vmatpush1.msra.mxu0 %v97
    %124 = vmatprep.subr.mxu0 0.0
    %125 = vmatpush1.msra.mxu0 %v98
    %126 = vmatprep.subr.mxu0 0.0
    %127 = vmatpush1.msra.mxu0 %v99
    %128 = vmatprep.subr.mxu0 0.0
    %129 = vmatpush1.msra.mxu0 %v100
    %130 = vmatprep.subr.mxu0 0.0
    %131 = vmatpush1.msra.mxu0 %v101
    %132 = vmatprep.subr.mxu0 0.0
    %133 = vmatpush1.msra.mxu0 %v102
    %134 = vmatprep.subr.mxu0 0.0
    %135 = vmatpush1.msra.mxu0 %v103
    %136 = vmatprep.subr.mxu0 0.0
    %137 = vmatpush1.msra.mxu0 %v104
    %138 = vmatprep.subr.mxu0 0.0
    %139 = vmatpush1.msra.mxu0 %v105
    %140 = vmatprep.subr.mxu0 0.0
    %141 = vmatpush1.msra.mxu0 %v106
    %142 = vmatprep.subr.mxu0 0.0
    %143 = vmatpush1.msra.mxu0 %v107
    %144 = vmatprep.subr.mxu0 0.0
    %145 = vmatpush1.msra.mxu0 %v108
    %146 = vmatprep.subr.mxu0 0.0
    %147 = vmatpush1.msra.mxu0 %v109
    %148 = vmatprep.subr.mxu0 0.0
    %149 = vmatpush1.msra.mxu0 %v110
    %150 = vmatprep.subr.mxu0 0.0
    %151 = vmatpush1.msra.mxu0 0.0
    %152 = vmatprep.subr.mxu0 0.0
    %153 = vmatpush1.msra.mxu0 0.0
    %154 = vmatprep.subr.mxu0 0.0
    %155 = vmatpush1.msra.mxu0 0.0
    %156 = vmatprep.subr.mxu0 0.0
    %157 = vmatpush1.msra.mxu0 0.0
    %158 = vmatprep.subr.mxu0 0.0
    %159 = vmatpush1.msra.mxu0 0.0
    %160 = vmatprep.subr.mxu0 0.0
    %161 = vmatpush1.msra.mxu0 0.0
    %162 = vmatprep.subr.mxu0 0.0
    %163 = vmatpush1.msra.mxu0 0.0
    %164 = vmatprep.subr.mxu0 0.0
    %165 = vmatpush1.msra.mxu0 0.0
    %166 = vmatprep.subr.mxu0 0.0
    %167 = vmatpush1.msra.mxu0 0.0
    %168 = vmatprep.subr.mxu0 0.0
    %169 = vmatpush1.msra.mxu0 0.0
    %170 = vmatprep.subr.mxu0 0.0
    %171 = vmatpush1.msra.mxu0 0.0
    %172 = vmatprep.subr.mxu0 0.0
    %173 = vmatpush1.msra.mxu0 0.0
    %174 = vmatprep.subr.mxu0 0.0
    %175 = vmatpush1.msra.mxu0 0.0
    %176 = vmatprep.subr.mxu0 0.0
    %177 = vmatpush1.msra.mxu0 0.0
    %178 = vmatprep.subr.mxu0 0.0
    %179 = vmatpush1.msra.mxu0 0.0
    %180 = vmatprep.subr.mxu0 0.0
    %181 = vmatpush1.msra.mxu0 0.0
    %182 = vmatprep.mubr.f32.mxu0 0.0
    %183 = vmatmul.mubr.f32.gmra.mrb[0].mxu0 %v94
    %v184 = vpop.f32.mrb[0].mxu0
    %v185 = vadd.f32 %v116, %v184
    %v186 = vpop.f32.mrb[0].mxu0
    %187 = vdwg.mxu0
    %v188 = vmax.f32 %v185, 0.0
    %v189 = vld [vmem:[#allocation10] sm:$0xff]
    %v190 = vld [vmem:[#allocation10 + $0x8] sm:$0xff]
    %v191 = vld [vmem:[#allocation10 + $0x10] sm:$0xff]
    %v192 = vld [vmem:[#allocation10 + $0x18] sm:$0xff]
    %v193 = vld [vmem:[#allocation10 + $0x20] sm:$0xff]
    %v194 = vld [vmem:[#allocation10 + $0x28] sm:$0xff]
    %v195 = vld [vmem:[#allocation10 + $0x30] sm:$0xff]
    %v196 = vld [vmem:[#allocation10 + $0x38] sm:$0xff]
    %v197 = vld [vmem:[#allocation10 + $0x40] sm:$0xff]
    %v198 = vld [vmem:[#allocation10 + $0x48] sm:$0xff]
    %v199 = vld [vmem:[#allocation10 + $0x50] sm:$0xff]
    %v200 = vld [vmem:[#allocation10 + $0x58] sm:$0xff]
    %v201 = vld [vmem:[#allocation10 + $0x60] sm:$0xff]
    %v202 = vld [vmem:[#allocation10 + $0x68] sm:$0xff]
    %v203 = vld [vmem:[#allocation10 + $0x70] sm:$0xff]
    %v204 = vld [vmem:[#allocation10 + $0x78] sm:$0xff]
    %v205 = vld [vmem:[%s7] sm:$0x1]
    %v207 = vlaneseq
    %v208 = vshrl.u32 %v207, 7
    %v209 = vsub.s32 0, %v208
    %v210 = vrot.slane %v205, %v209
    %212 = vmatprep.subr.mxu0 0.0
    %213 = vmatpush1.msra.mxu0 %v189
    %214 = vmatprep.subr.mxu0 0.0
    %215 = vmatpush1.msra.mxu0 %v190
    %216 = vmatprep.subr.mxu0 0.0
    %217 = vmatpush1.msra.mxu0 %v191
    %218 = vmatprep.subr.mxu0 0.0
    %219 = vmatpush1.msra.mxu0 %v192
    %220 = vmatprep.subr.mxu0 0.0
    %221 = vmatpush1.msra.mxu0 %v193
    %222 = vmatprep.subr.mxu0 0.0
    %223 = vmatpush1.msra.mxu0 %v194
    %224 = vmatprep.subr.mxu0 0.0
    %225 = vmatpush1.msra.mxu0 %v195
    %226 = vmatprep.subr.mxu0 0.0
    %227 = vmatpush1.msra.mxu0 %v196
    %228 = vmatprep.subr.mxu0 0.0
    %229 = vmatpush1.msra.mxu0 %v197
    %230 = vmatprep.subr.mxu0 0.0
    %231 = vmatpush1.msra.mxu0 %v198
    %232 = vmatprep.subr.mxu0 0.0
    %233 = vmatpush1.msra.mxu0 %v199
    %234 = vmatprep.subr.mxu0 0.0
    %235 = vmatpush1.msra.mxu0 %v200
    %236 = vmatprep.subr.mxu0 0.0
    %237 = vmatpush1.msra.mxu0 %v201
    %238 = vmatprep.subr.mxu0 0.0
    %239 = vmatpush1.msra.mxu0 %v202
    %240 = vmatprep.subr.mxu0 0.0
    %241 = vmatpush1.msra.mxu0 %v203
    %242 = vmatprep.subr.mxu0 0.0
    %243 = vmatpush1.msra.mxu0 %v204
    %244 = vmatprep.subr.mxu0 0.0
    %245 = vmatpush1.msra.mxu0 0.0
    %246 = vmatprep.subr.mxu0 0.0
    %247 = vmatpush1.msra.mxu0 0.0
    %248 = vmatprep.subr.mxu0 0.0
    %249 = vmatpush1.msra.mxu0 0.0
    %250 = vmatprep.subr.mxu0 0.0
    %251 = vmatpush1.msra.mxu0 0.0
    %252 = vmatprep.subr.mxu0 0.0
    %253 = vmatpush1.msra.mxu0 0.0
    %254 = vmatprep.subr.mxu0 0.0
    %255 = vmatpush1.msra.mxu0 0.0
    %256 = vmatprep.subr.mxu0 0.0
    %257 = vmatpush1.msra.mxu0 0.0
    %258 = vmatprep.subr.mxu0 0.0
    %259 = vmatpush1.msra.mxu0 0.0
    %260 = vmatprep.subr.mxu0 0.0
    %261 = vmatpush1.msra.mxu0 0.0
    %262 = vmatprep.subr.mxu0 0.0
    %263 = vmatpush1.msra.mxu0 0.0
    %264 = vmatprep.subr.mxu0 0.0
    %265 = vmatpush1.msra.mxu0 0.0
    %266 = vmatprep.subr.mxu0 0.0
    %267 = vmatpush1.msra.mxu0 0.0
    %268 = vmatprep.subr.mxu0 0.0
    %269 = vmatpush1.msra.mxu0 0.0
    %270 = vmatprep.subr.mxu0 0.0
    %271 = vmatpush1.msra.mxu0 0.0
    %272 = vmatprep.subr.mxu0 0.0
    %273 = vmatpush1.msra.mxu0 0.0
    %274 = vmatprep.subr.mxu0 0.0
    %275 = vmatpush1.msra.mxu0 0.0
    %276 = vmatprep.mubr.f32.mxu0 0.0
    %277 = vmatmul.mubr.f32.gmra.mrb[0].mxu0 %v188
    %v278 = vpop.f32.mrb[0].mxu0
    %v279 = vadd.f32 %v210, %v278
    %v280 = vpop.f32.mrb[0].mxu0
    %281 = vdwg.mxu0
    %282 = vst [vmem:[#allocation11] sm:$0xff] %v279
    %v283 = vld [vmem:[#allocation5] sm:$0xff]
    %v284 = vld [vmem:[#allocation8] sm:$0xff]
    %v285 = vld [vmem:[#allocation8 + $0x8] sm:$0xff]
    %v286 = vld [vmem:[#allocation8 + $0x10] sm:$0xff]
    %v287 = vld [vmem:[#allocation8 + $0x18] sm:$0xff]
    %v288 = vld [vmem:[#allocation8 + $0x20] sm:$0xff]
    %v289 = vld [vmem:[#allocation8 + $0x28] sm:$0xff]
    %v290 = vld [vmem:[#allocation8 + $0x30] sm:$0xff]
    %v291 = vld [vmem:[#allocation8 + $0x38] sm:$0xff]
    %v292 = vld [vmem:[#allocation8 + $0x40] sm:$0xff]
    %v293 = vld [vmem:[#allocation8 + $0x48] sm:$0xff]
    %v294 = vld [vmem:[#allocation8 + $0x50] sm:$0xff]
    %v295 = vld [vmem:[#allocation8 + $0x58] sm:$0xff]
    %v296 = vld [vmem:[#allocation8 + $0x60] sm:$0xff]
    %v297 = vld [vmem:[#allocation8 + $0x68] sm:$0xff]
    %v298 = vld [vmem:[#allocation8 + $0x70] sm:$0xff]
    %v299 = vld [vmem:[#allocation8 + $0x78] sm:$0xff]
    %v300 = vld [vmem:[%s5] sm:$0x1]
    %v302 = vlaneseq
    %v303 = vshrl.u32 %v302, 7
    %v304 = vsub.s32 0, %v303
    %v305 = vrot.slane %v300, %v304
    %307 = vmatprep.subr.mxu0 0.0
    %308 = vmatpush1.msra.mxu0 %v284
    %309 = vmatprep.subr.mxu0 0.0
    %310 = vmatpush1.msra.mxu0 %v285
    %311 = vmatprep.subr.mxu0 0.0
    %312 = vmatpush1.msra.mxu0 %v286
    %313 = vmatprep.subr.mxu0 0.0
    %314 = vmatpush1.msra.mxu0 %v287
    %315 = vmatprep.subr.mxu0 0.0
    %316 = vmatpush1.msra.mxu0 %v288
    %317 = vmatprep.subr.mxu0 0.0
    %318 = vmatpush1.msra.mxu0 %v289
    %319 = vmatprep.subr.mxu0 0.0
    %320 = vmatpush1.msra.mxu0 %v290
    %321 = vmatprep.subr.mxu0 0.0
    %322 = vmatpush1.msra.mxu0 %v291
    %323 = vmatprep.subr.mxu0 0.0
    %324 = vmatpush1.msra.mxu0 %v292
    %325 = vmatprep.subr.mxu0 0.0
    %326 = vmatpush1.msra.mxu0 %v293
    %327 = vmatprep.subr.mxu0 0.0
    %328 = vmatpush1.msra.mxu0 %v294
    %329 = vmatprep.subr.mxu0 0.0
    %330 = vmatpush1.msra.mxu0 %v295
    %331 = vmatprep.subr.mxu0 0.0
    %332 = vmatpush1.msra.mxu0 %v296
    %333 = vmatprep.subr.mxu0 0.0
    %334 = vmatpush1.msra.mxu0 %v297
    %335 = vmatprep.subr.mxu0 0.0
    %336 = vmatpush1.msra.mxu0 %v298
    %337 = vmatprep.subr.mxu0 0.0
    %338 = vmatpush1.msra.mxu0 %v299
    %339 = vmatprep.subr.mxu0 0.0
    %340 = vmatpush1.msra.mxu0 0.0
    %341 = vmatprep.subr.mxu0 0.0
    %342 = vmatpush1.msra.mxu0 0.0
    %343 = vmatprep.subr.mxu0 0.0
    %344 = vmatpush1.msra.mxu0 0.0
    %345 = vmatprep.subr.mxu0 0.0
    %346 = vmatpush1.msra.mxu0 0.0
    %347 = vmatprep.subr.mxu0 0.0
    %348 = vmatpush1.msra.mxu0 0.0
    %349 = vmatprep.subr.mxu0 0.0
    %350 = vmatpush1.msra.mxu0 0.0
    %351 = vmatprep.subr.mxu0 0.0
    %352 = vmatpush1.msra.mxu0 0.0
    %353 = vmatprep.subr.mxu0 0.0
    %354 = vmatpush1.msra.mxu0 0.0
    %355 = vmatprep.subr.mxu0 0.0
    %356 = vmatpush1.msra.mxu0 0.0
    %357 = vmatprep.subr.mxu0 0.0
    %358 = vmatpush1.msra.mxu0 0.0
    %359 = vmatprep.subr.mxu0 0.0
    %360 = vmatpush1.msra.mxu0 0.0
    %361 = vmatprep.subr.mxu0 0.0
    %362 = vmatpush1.msra.mxu0 0.0
    %363 = vmatprep.subr.mxu0 0.0
    %364 = vmatpush1.msra.mxu0 0.0
    %365 = vmatprep.subr.mxu0 0.0
    %366 = vmatpush1.msra.mxu0 0.0
    %367 = vmatprep.subr.mxu0 0.0
    %368 = vmatpush1.msra.mxu0 0.0
    %369 = vmatprep.subr.mxu0 0.0
    %370 = vmatpush1.msra.mxu0 0.0
    %371 = vmatprep.mubr.f32.mxu0 0.0
    %372 = vmatmul.mubr.f32.gmra.mrb[0].mxu0 %v283
    %v373 = vpop.f32.mrb[0].mxu0
    %v374 = vadd.f32 %v305, %v373
    %v375 = vpop.f32.mrb[0].mxu0
    %376 = vdwg.mxu0
    %v377 = vmax.f32 %v374, 0.0
    %v378 = vld [vmem:[#allocation10] sm:$0xff]
    %v379 = vld [vmem:[#allocation10 + $0x8] sm:$0xff]
    %v380 = vld [vmem:[#allocation10 + $0x10] sm:$0xff]
    %v381 = vld [vmem:[#allocation10 + $0x18] sm:$0xff]
    %v382 = vld [vmem:[#allocation10 + $0x20] sm:$0xff]
    %v383 = vld [vmem:[#allocation10 + $0x28] sm:$0xff]
    %v384 = vld [vmem:[#allocation10 + $0x30] sm:$0xff]
    %v385 = vld [vmem:[#allocation10 + $0x38] sm:$0xff]
    %v386 = vld [vmem:[#allocation10 + $0x40] sm:$0xff]
    %v387 = vld [vmem:[#allocation10 + $0x48] sm:$0xff]
    %v388 = vld [vmem:[#allocation10 + $0x50] sm:$0xff]
    %v389 = vld [vmem:[#allocation10 + $0x58] sm:$0xff]
    %v390 = vld [vmem:[#allocation10 + $0x60] sm:$0xff]
    %v391 = vld [vmem:[#allocation10 + $0x68] sm:$0xff]
    %v392 = vld [vmem:[#allocation10 + $0x70] sm:$0xff]
    %v393 = vld [vmem:[#allocation10 + $0x78] sm:$0xff]
    %v394 = vld [vmem:[%s7] sm:$0x1]
    %v396 = vlaneseq
    %v397 = vshrl.u32 %v396, 7
    %v398 = vsub.s32 0, %v397
    %v399 = vrot.slane %v394, %v398
    %401 = vmatprep.subr.mxu0 0.0
    %402 = vmatpush1.msra.mxu0 %v378
    %403 = vmatprep.subr.mxu0 0.0
    %404 = vmatpush1.msra.mxu0 %v379
    %405 = vmatprep.subr.mxu0 0.0
    %406 = vmatpush1.msra.mxu0 %v380
    %407 = vmatprep.subr.mxu0 0.0
    %408 = vmatpush1.msra.mxu0 %v381
    %409 = vmatprep.subr.mxu0 0.0
    %410 = vmatpush1.msra.mxu0 %v382
    %411 = vmatprep.subr.mxu0 0.0
    %412 = vmatpush1.msra.mxu0 %v383
    %413 = vmatprep.subr.mxu0 0.0
    %414 = vmatpush1.msra.mxu0 %v384
    %415 = vmatprep.subr.mxu0 0.0
    %416 = vmatpush1.msra.mxu0 %v385
    %417 = vmatprep.subr.mxu0 0.0
    %418 = vmatpush1.msra.mxu0 %v386
    %419 = vmatprep.subr.mxu0 0.0
    %420 = vmatpush1.msra.mxu0 %v387
    %421 = vmatprep.subr.mxu0 0.0
    %422 = vmatpush1.msra.mxu0 %v388
    %423 = vmatprep.subr.mxu0 0.0
    %424 = vmatpush1.msra.mxu0 %v389
    %425 = vmatprep.subr.mxu0 0.0
    %426 = vmatpush1.msra.mxu0 %v390
    %427 = vmatprep.subr.mxu0 0.0
    %428 = vmatpush1.msra.mxu0 %v391
    %429 = vmatprep.subr.mxu0 0.0
    %430 = vmatpush1.msra.mxu0 %v392
    %431 = vmatprep.subr.mxu0 0.0
    %432 = vmatpush1.msra.mxu0 %v393
    %433 = vmatprep.subr.mxu0 0.0
    %434 = vmatpush1.msra.mxu0 0.0
    %435 = vmatprep.subr.mxu0 0.0
    %436 = vmatpush1.msra.mxu0 0.0
    %437 = vmatprep.subr.mxu0 0.0
    %438 = vmatpush1.msra.mxu0 0.0
    %439 = vmatprep.subr.mxu0 0.0
    %440 = vmatpush1.msra.mxu0 0.0
    %441 = vmatprep.subr.mxu0 0.0
    %442 = vmatpush1.msra.mxu0 0.0
    %443 = vmatprep.subr.mxu0 0.0
    %444 = vmatpush1.msra.mxu0 0.0
    %445 = vmatprep.subr.mxu0 0.0
    %446 = vmatpush1.msra.mxu0 0.0
    %447 = vmatprep.subr.mxu0 0.0
    %448 = vmatpush1.msra.mxu0 0.0
    %449 = vmatprep.subr.mxu0 0.0
    %450 = vmatpush1.msra.mxu0 0.0
    %451 = vmatprep.subr.mxu0 0.0
    %452 = vmatpush1.msra.mxu0 0.0
    %453 = vmatprep.subr.mxu0 0.0
    %454 = vmatpush1.msra.mxu0 0.0
    %455 = vmatprep.subr.mxu0 0.0
    %456 = vmatpush1.msra.mxu0 0.0
    %457 = vmatprep.subr.mxu0 0.0
    %458 = vmatpush1.msra.mxu0 0.0
    %459 = vmatprep.subr.mxu0 0.0
    %460 = vmatpush1.msra.mxu0 0.0
    %461 = vmatprep.subr.mxu0 0.0
    %462 = vmatpush1.msra.mxu0 0.0
    %463 = vmatprep.subr.mxu0 0.0
    %464 = vmatpush1.msra.mxu0 0.0
    %465 = vmatprep.mubr.f32.mxu0 0.0
    %466 = vmatmul.mubr.f32.gmra.mrb[0].mxu0 %v377
    %v467 = vpop.f32.mrb[0].mxu0
    %v468 = vadd.f32 %v399, %v467
    %v469 = vpop.f32.mrb[0].mxu0
    %470 = vdwg.mxu0
    %471 = vst [vmem:[#allocation11 + $0x8] sm:$0xff] %v468
    // Predicated region
    $region54: #{fused.1} parent=1 // pred_check
      _
    $region55: #{fused.1} parent=1 // pred_check_branch
      %473 = sbr.rel (0) target = $region57
    $region56: #{fused.1} parent=1 // pred_region
      %s475 = ssub.s32 256, 256
      %476 = vsyncadd [#allocation4], %s475
      %s477 = sshll.u32 [#allocation11], 4
      %s478 = int_to_ptr.vmem [resolvable:$true] %s477
      %483 = dma.vmem_to_hbm [thread:$0]  %s478, 256, %s8, [#allocation4], 128, 128, 8
    $region57: #{fused.1} parent=1 // pred_fallthru
      _
    // Predicated region
    $region58: #{fused.1} parent=1 // pred_check
      _
    $region59: #{fused.1} parent=1 // pred_check_branch
      %485 = sbr.rel (0) target = $region61
    $region60: #{fused.1} parent=1 // pred_region
      %486 = dma.done [#allocation4], 256
    $region61: #{fused.1} parent=1 // pred_fallthru
      _
    %487 = vsyncpa [#allocation3], 1
    %488 = vsyncpa [#allocation6], 1
    %489 = vsyncpa [#allocation9], 1
    %490 = vsyncpa [#allocation4], 1

</llo_original>
